<compile_context>
chip_gen: v7x
topology: tpu7x:2x2x1
jax: 0.10.0
libtpu: 0.0.40
codegen_flags: <defaults>
</compile_context>

<pallas_src>
import math

import jax
import jax.numpy as jnp
from jax.experimental import pallas as pl
from jax.experimental.pallas import tpu as pltpu

_LANES = 128          # lane-dense last dim (full vreg width)
_MAX_ROW_TILE = 1024  # max sublane rows per grid step (multiple of 8); ~2 MiB/block


def _quanv_kernel(w_ref, p_ref, o_ref):
    # w_ref (SMEM, (6,)): [cos w0, cos w1, cos w0*cos w2, cos w0*cos w3, sin w2, sin w3]
    # p_ref (VMEM, (4, TR, 128)): packed patch corners [a; b; c; d], lane-dense.
    # o_ref (VMEM, (4, TR, 128)): <Z0..Z3> for every patch in the tile.
    a = p_ref[0]
    b = p_ref[1]
    c = p_ref[2]
    d = p_ref[3]

    # 7 EUP transcendentals per patch-vreg; all are needed for the 4 outputs.
    cos_a = jnp.cos(a)
    sin_a = jnp.sin(a)
    cos_b = jnp.cos(b)
    cos_c = jnp.cos(c)
    sin_c = jnp.sin(c)
    cos_d = jnp.cos(d)
    sin_d = jnp.sin(d)

    cw0 = w_ref[0]
    cw1 = w_ref[1]
    cw02 = w_ref[2]  # cos(w0) * cos(w2)   (hoisted on host)
    cw03 = w_ref[3]  # cos(w0) * cos(w3)
    sw2 = w_ref[4]
    sw3 = w_ref[5]

    ca_cc = cos_a * cos_c

    # Per-qubit full-plane, lane-dense, unmasked stores (no stack/concat temp).
    o_ref[0] = cw02 * cos_a - sw2 * (sin_a * sin_c)
    o_ref[1] = cw1 * cos_b
    o_ref[2] = cw0 * ca_cc
    o_ref[3] = cw03 * (ca_cc * cos_d) - sw3 * sin_d


def quanvolution_forward(x, weights):
    """x: (B, C, H, W) float; weights: (1, 4) circuit params -> (B, 4, H//2, W//2) f32."""
    B, _, H, W = x.shape
    Ho, Wo = H // 2, W // 2  # (PyTorch loop assumes even H/W; floor matches usable patches)
    N = B * Ho * Wo

    # --- glue: pack the 4 pixels of every 2x2 / stride-2 patch into ONE lane-dense
    # slab (4, rows_pad, 128). One fused XLA transpose+pad copy, one DMA stream.
    xc = x[:, 0, : 2 * Ho, : 2 * Wo].astype(jnp.float32)  # only channel 0 (as in ref)
    patches = xc.reshape(B, Ho, 2, Wo, 2)
    packed = patches.transpose(2, 4, 0, 1, 3).reshape(4, N)  # rows: a, b, c, d

    rows = (N + _LANES - 1) // _LANES
    row_tile = min(_MAX_ROW_TILE, ((rows + 7) // 8) * 8)          # multiple of 8
    rows_pad = ((rows + row_tile - 1) // row_tile) * row_tile     # multiple of row_tile
    n_pad = rows_pad * _LANES
    packed = jnp.pad(packed, ((0, 0), (0, n_pad - N)))
    packed = packed.reshape(4, rows_pad, _LANES)

    # --- glue: scalar weight trig with constant products hoisted to the host.
    w = weights[0].astype(jnp.float32)
    cw = jnp.cos(w)
    sw = jnp.sin(w)
    wvec = jnp.stack([cw[0], cw[1], cw[0] * cw[2], cw[0] * cw[3], sw[2], sw[3]])

    cost = pl.CostEstimate(
        flops=12 * n_pad,                 # ~12 VPU mul/add per patch
        transcendentals=7 * n_pad,        # 7 sin/cos per patch (EUP)
        bytes_accessed=(4 + 4) * 4 * n_pad,
    )

    block = pl.BlockSpec((4, row_tile, _LANES), lambda i: (0, i, 0))
    out = pl.pallas_call(
        _quanv_kernel,
        out_shape=jax.ShapeDtypeStruct((4, rows_pad, _LANES), jnp.float32),
        grid=(rows_pad // row_tile,),
        in_specs=[
            pl.BlockSpec(memory_space=pltpu.MemorySpace.SMEM),  # weight scalars
            block,
        ],
        out_specs=block,
        compiler_params=pltpu.CompilerParams(
            dimension_semantics=("parallel",),  # row-tile axis shards across TCs (v7x)
        ),
        cost_estimate=cost,
    )(wvec, packed)

    # --- glue: unflatten back to the PyTorch layout (B, 4, Ho, Wo).
    out = out.reshape(4, n_pad)[:, :N].reshape(4, B, Ho, Wo)
    return jnp.transpose(out, (1, 0, 2, 3))


def _reference(x, weights):
    """Pure-JAX reference of the analytic circuit expectations (for validation)."""
    xc = x[:, 0]
    a = xc[:, 0::2, 0::2]
    b = xc[:, 0::2, 1::2]
    c = xc[:, 1::2, 0::2]
    d = xc[:, 1::2, 1::2]
    w0, w1, w2, w3 = [weights[0, i] for i in range(4)]
    z0 = jnp.cos(w2) * jnp.cos(w0) * jnp.cos(a) - jnp.sin(w2) * jnp.sin(a) * jnp.sin(c)
    z1 = jnp.cos(w1) * jnp.cos(b)
    z2 = jnp.cos(w0) * jnp.cos(a) * jnp.cos(c)
    z3 = (jnp.cos(w3) * jnp.cos(w0) * jnp.cos(a) * jnp.cos(c) * jnp.cos(d)
          - jnp.sin(w3) * jnp.sin(d))
    return jnp.stack([z0, z1, z2, z3], axis=1)


if __name__ == "__main__":
    key = jax.random.PRNGKey(0)
    kx, kw = jax.random.split(key)
    # MNIST-like small input: batch=2, channels=1, 16x16 spatial.
    x = jax.random.uniform(kx, (2, 1, 16, 16), jnp.float32, minval=0.0, maxval=math.pi)
    # TorchLayer default init: uniform in [0, 2*pi) for weight_shapes (1, 4).
    weights = jax.random.uniform(kw, (1, 4), jnp.float32, minval=0.0, maxval=2.0 * math.pi)

    out = jax.block_until_ready(quanvolution_forward(x, weights))
    ref = _reference(x, weights)

    assert out.shape == (2, 4, 8, 8), out.shape
    assert jnp.allclose(out, ref, atol=1e-5), float(jnp.max(jnp.abs(out - ref)))
    print("KERNEL_OK")
</pallas_src>

<mosaic_0001>
module attributes {stable_mosaic.version = 11 : i64} {
  func.func @_quanv_kernel(%arg0: i32, %arg1: memref<6xf32, #tpu.memory_space<smem>>, %arg2: memref<4x8x128xf32, #tpu.memory_space<vmem>>, %arg3: memref<4x8x128xf32, #tpu.memory_space<vmem>>) attributes {dimension_semantics = [#tpu.dimension_semantics<parallel>], iteration_bounds = array<i64: 1>, scalar_prefetch = 0 : i64, scratch_operands = 0 : i64, tpu.core_type = #tpu.core_type<tc>, window_params = [{transform_indices = @transform_0, window_bounds = array<i64: 6>}, {transform_indices = @transform_1, window_bounds = array<i64: 4, 8, 128>}, {transform_indices = @transform_2, window_bounds = array<i64: 4, 8, 128>}]} {
    %c0 = arith.constant 0 : index
    %c0_0 = arith.constant 0 : index
    %c0_1 = arith.constant 0 : index
    %0 = vector.load %arg2[%c0, %c0_0, %c0_1] : memref<4x8x128xf32, #tpu.memory_space<vmem>>, vector<1x8x128xf32>
    %1 = vector.shape_cast %0 : vector<1x8x128xf32> to vector<8x128xf32>
    %c1 = arith.constant 1 : index
    %c0_2 = arith.constant 0 : index
    %c0_3 = arith.constant 0 : index
    %2 = vector.load %arg2[%c1, %c0_2, %c0_3] : memref<4x8x128xf32, #tpu.memory_space<vmem>>, vector<1x8x128xf32>
    %3 = vector.shape_cast %2 : vector<1x8x128xf32> to vector<8x128xf32>
    %c2 = arith.constant 2 : index
    %c0_4 = arith.constant 0 : index
    %c0_5 = arith.constant 0 : index
    %4 = vector.load %arg2[%c2, %c0_4, %c0_5] : memref<4x8x128xf32, #tpu.memory_space<vmem>>, vector<1x8x128xf32>
    %5 = vector.shape_cast %4 : vector<1x8x128xf32> to vector<8x128xf32>
    %c3 = arith.constant 3 : index
    %c0_6 = arith.constant 0 : index
    %c0_7 = arith.constant 0 : index
    %6 = vector.load %arg2[%c3, %c0_6, %c0_7] : memref<4x8x128xf32, #tpu.memory_space<vmem>>, vector<1x8x128xf32>
    %7 = vector.shape_cast %6 : vector<1x8x128xf32> to vector<8x128xf32>
    %8 = math.cos %1 : vector<8x128xf32>
    %9 = math.sin %1 : vector<8x128xf32>
    %10 = math.cos %3 : vector<8x128xf32>
    %11 = math.cos %5 : vector<8x128xf32>
    %12 = math.sin %5 : vector<8x128xf32>
    %13 = math.cos %7 : vector<8x128xf32>
    %14 = math.sin %7 : vector<8x128xf32>
    %c0_8 = arith.constant 0 : index
    %15 = memref.load %arg1[%c0_8] : memref<6xf32, #tpu.memory_space<smem>>
    %c1_9 = arith.constant 1 : index
    %16 = memref.load %arg1[%c1_9] : memref<6xf32, #tpu.memory_space<smem>>
    %c2_10 = arith.constant 2 : index
    %17 = memref.load %arg1[%c2_10] : memref<6xf32, #tpu.memory_space<smem>>
    %c3_11 = arith.constant 3 : index
    %18 = memref.load %arg1[%c3_11] : memref<6xf32, #tpu.memory_space<smem>>
    %c4 = arith.constant 4 : index
    %19 = memref.load %arg1[%c4] : memref<6xf32, #tpu.memory_space<smem>>
    %c5 = arith.constant 5 : index
    %20 = memref.load %arg1[%c5] : memref<6xf32, #tpu.memory_space<smem>>
    %21 = arith.mulf %8, %11 : vector<8x128xf32>
    %22 = vector.broadcast %17 : f32 to vector<8x128xf32>
    %23 = arith.mulf %22, %8 : vector<8x128xf32>
    %24 = arith.mulf %9, %12 : vector<8x128xf32>
    %25 = vector.broadcast %19 : f32 to vector<8x128xf32>
    %26 = arith.mulf %25, %24 : vector<8x128xf32>
    %27 = arith.subf %23, %26 : vector<8x128xf32>
    %c0_12 = arith.constant 0 : index
    %c0_13 = arith.constant 0 : index
    %c0_14 = arith.constant 0 : index
    %28 = vector.load %arg3[%c0_12, %c0_13, %c0_14] : memref<4x8x128xf32, #tpu.memory_space<vmem>>, vector<1x8x128xf32>
    %29 = vector.shape_cast %28 : vector<1x8x128xf32> to vector<8x128xf32>
    %30 = vector.shape_cast %27 : vector<8x128xf32> to vector<1x8x128xf32>
    tpu.vector_store %arg3[%c0_12, %c0_13, %c0_14], %30 {strides = array<i32>} : memref<4x8x128xf32, #tpu.memory_space<vmem>>, vector<1x8x128xf32>,
    %31 = vector.broadcast %16 : f32 to vector<8x128xf32>
    %32 = arith.mulf %31, %10 : vector<8x128xf32>
    %c1_15 = arith.constant 1 : index
    %c0_16 = arith.constant 0 : index
    %c0_17 = arith.constant 0 : index
    %33 = vector.load %arg3[%c1_15, %c0_16, %c0_17] : memref<4x8x128xf32, #tpu.memory_space<vmem>>, vector<1x8x128xf32>
    %34 = vector.shape_cast %33 : vector<1x8x128xf32> to vector<8x128xf32>
    %35 = vector.shape_cast %32 : vector<8x128xf32> to vector<1x8x128xf32>
    tpu.vector_store %arg3[%c1_15, %c0_16, %c0_17], %35 {strides = array<i32>} : memref<4x8x128xf32, #tpu.memory_space<vmem>>, vector<1x8x128xf32>,
    %36 = vector.broadcast %15 : f32 to vector<8x128xf32>
    %37 = arith.mulf %36, %21 : vector<8x128xf32>
    %c2_18 = arith.constant 2 : index
    %c0_19 = arith.constant 0 : index
    %c0_20 = arith.constant 0 : index
    %38 = vector.load %arg3[%c2_18, %c0_19, %c0_20] : memref<4x8x128xf32, #tpu.memory_space<vmem>>, vector<1x8x128xf32>
    %39 = vector.shape_cast %38 : vector<1x8x128xf32> to vector<8x128xf32>
    %40 = vector.shape_cast %37 : vector<8x128xf32> to vector<1x8x128xf32>
    tpu.vector_store %arg3[%c2_18, %c0_19, %c0_20], %40 {strides = array<i32>} : memref<4x8x128xf32, #tpu.memory_space<vmem>>, vector<1x8x128xf32>,
    %41 = arith.mulf %21, %13 : vector<8x128xf32>
    %42 = vector.broadcast %18 : f32 to vector<8x128xf32>
    %43 = arith.mulf %42, %41 : vector<8x128xf32>
    %44 = vector.broadcast %20 : f32 to vector<8x128xf32>
    %45 = arith.mulf %44, %14 : vector<8x128xf32>
    %46 = arith.subf %43, %45 : vector<8x128xf32>
    %c3_21 = arith.constant 3 : index
    %c0_22 = arith.constant 0 : index
    %c0_23 = arith.constant 0 : index
    %47 = vector.load %arg3[%c3_21, %c0_22, %c0_23] : memref<4x8x128xf32, #tpu.memory_space<vmem>>, vector<1x8x128xf32>
    %48 = vector.shape_cast %47 : vector<1x8x128xf32> to vector<8x128xf32>
    %49 = vector.shape_cast %46 : vector<8x128xf32> to vector<1x8x128xf32>
    tpu.vector_store %arg3[%c3_21, %c0_22, %c0_23], %49 {strides = array<i32>} : memref<4x8x128xf32, #tpu.memory_space<vmem>>, vector<1x8x128xf32>,
    return
  }
  func.func @transform_0(%arg0: i32) -> i32 {
    %c0_i32 = arith.constant 0 : i32
    %c0_i32_0 = arith.constant 0 : i32
    return %c0_i32 : i32
  }
  func.func @transform_1(%arg0: i32) -> (i32, i32, i32) {
    %c0_i32 = arith.constant 0 : i32
    %c0_i32_0 = arith.constant 0 : i32
    %c0_i32_1 = arith.constant 0 : i32
    return %c0_i32, %arg0, %c0_i32_0 : i32, i32, i32
  }
  func.func @transform_2(%arg0: i32) -> (i32, i32, i32) {
    %c0_i32 = arith.constant 0 : i32
    %c0_i32_0 = arith.constant 0 : i32
    %c0_i32_1 = arith.constant 0 : i32
    return %c0_i32, %arg0, %c0_i32_0 : i32, i32, i32
  }
}

</mosaic_0001>

<llo_original>
// kernel: tpu_custom_call.1
$region0: #{tpu_custom_call.1}
  #allocation0 [shape = 'u32[]', space=smem, size = 0x4, offset = 0x4, fixed_abs, tag = 'smem constant byte address 0x4 - core index']
  #allocation1 [shape = 'u32[144,128]{1,0:T(1,128)}', space=vmem, size = 0x12000, scoped, tag = 'internal scratch']
  %s0 = inlined_call_operand.hbm [shape: f32[6], index: 0, kind: input, shape index: {}]
  %s1 = inlined_call_operand.hbm [shape: f32[4,8,128], index: 1, kind: input, shape index: {}]
  %s2 = inlined_call_operand.hbm [shape: f32[4,8,128], index: 2, kind: output, shape index: {}]
  %s3 = sld [smem:[#allocation0]]
  $region26: #{tpu_custom_call.1} parent=0
    _
  %s5 = ssub.s32 1, %s3
  %s6 = scalar_select 0, %s5, %s3
  $region1: #{tpu_custom_call.1} parent=0
    #allocation2 [shape = 'u8[512]{0}', space=smem, size = 0x200, scoped, tag = 'input window, operand 0, single buffered']
    #allocation3 [shape = 's32[1]{0}', space=sflag, size = 0x4, scoped, tag = 'scoped memory for tpu_custom_call.1']
    #allocation4 [shape = 's32[1]{0}', space=sflag, size = 0x4, scoped, tag = 'scoped memory for tpu_custom_call.1']
    #allocation5 [shape = 's32[1]{0}', space=sflag, size = 0x4, scoped, tag = 'scoped memory for tpu_custom_call.1']
    #allocation6 [shape = 'u8[16384]{0}', space=vmem, size = 0x4000, scoped, tag = 'input window, operand 1, single buffered']
    #allocation7 [shape = 'u8[16384]{0}', space=vmem, size = 0x4000, scoped, tag = 'output window, operand 0, single buffered']
    %7 = vsyncpa [#allocation5], 0
    %8 = vsyncpa [#allocation3], 0
    %9 = vsyncpa [#allocation4], 0
    // Predicated region
    $region2: #{tpu_custom_call.1} parent=1 // pred_check
      _
    $region3: #{tpu_custom_call.1} parent=1 // pred_check_branch
      %11 = sbr.rel (0) target = $region5
    $region4: #{tpu_custom_call.1} parent=1 // pred_region
      %s13 = ssub.s32 16, 16
      %14 = vsyncadd [#allocation5], %s13
      %17 = dma.hbm_to_smem %s0, 16, [#allocation2], [#allocation5]
    $region5: #{tpu_custom_call.1} parent=1 // pred_fallthru
      _
    // Predicated region
    $region6: #{tpu_custom_call.1} parent=1 // pred_check
      _
    $region7: #{tpu_custom_call.1} parent=1 // pred_check_branch
      %19 = sbr.rel (0) target = $region9
    $region8: #{tpu_custom_call.1} parent=1 // pred_region
      %s21 = ssub.s32 512, 512
      %22 = vsyncadd [#allocation3], %s21
      %s23 = sshll.u32 [#allocation6], 4
      %s24 = int_to_ptr.vmem [resolvable:$true] %s23
      %29 = dma.hbm_to_vmem [thread:$0]  %s1, 512, %s24, [#allocation3], 128, 128, 8
    $region9: #{tpu_custom_call.1} parent=1 // pred_fallthru
      _
    // Predicated region
    $region10: #{tpu_custom_call.1} parent=1 // pred_check
      _
    $region11: #{tpu_custom_call.1} parent=1 // pred_check_branch
      %31 = sbr.rel (0) target = $region13
    $region12: #{tpu_custom_call.1} parent=1 // pred_region
      %32 = dma.done [#allocation5], 16
    $region13: #{tpu_custom_call.1} parent=1 // pred_fallthru
      _
    // Predicated region
    $region14: #{tpu_custom_call.1} parent=1 // pred_check
      _
    $region15: #{tpu_custom_call.1} parent=1 // pred_check_branch
      %34 = sbr.rel (0) target = $region17
    $region16: #{tpu_custom_call.1} parent=1 // pred_region
      %35 = dma.done [#allocation3], 512
    $region17: #{tpu_custom_call.1} parent=1 // pred_fallthru
      _
    %36 = sfence
    %v37 = vld [vmem:[#allocation6] sm:$0xff]
    %s38 = scalar_lea.vmem [#allocation6], 8
    %v39 = vld [vmem:[%s38] sm:$0xff]
    %s40 = scalar_lea.vmem [#allocation6], 16
    %v41 = vld [vmem:[%s40] sm:$0xff]
    %s42 = scalar_lea.vmem [#allocation6], 24
    %v43 = vld [vmem:[%s42] sm:$0xff]
    %v44 = vand.u32 2147483647, %v37
    %vm45 = vcmp.le.f32.partialorder %v44, 0.7853982
    %vm46 = vcmp.lt.s32.totalorder %v37, 0
    %v47 = vand.u32 %v37, 2139095040
    %v48 = vshrl.u32 %v47, 23
    %v49 = vsub.s32 %v48, 127
    %v50 = vand.u32 2147483647, %v37
    %v51 = vand.u32 %v50, 8388607
    %v52 = vor.u32 %v51, 8388608
    %v53 = vsub.s32 0, %v52
    %v54 = vadd.s32 %v49, 1
    %vm55 = vcmp.gt.s32.totalorder %v54, 0
    %v56 = vsel %vm55, %v54, 0
    %v57 = vshrl.u32 %v56, 5
    %v58 = vand.u32 %v56, 31
    %v59 = vsub.s32 32, %v58
    %v60 = vshrl.u32 683565275, %v59
    %v61 = vshll.u32 683565275, %v58
    %v62 = vshrl.u32 2475754826, %v59
    %v63 = vor.u32 %v61, %v62
    %v64 = vshll.u32 2475754826, %v58
    %v65 = vshrl.u32 2131351028, %v59
    %v66 = vor.u32 %v64, %v65
    %v67 = vshll.u32 2131351028, %v58
    %v68 = vshrl.u32 2102212464, %v59
    %v69 = vor.u32 %v67, %v68
    %v70 = vshll.u32 2102212464, %v58
    %v71 = vshrl.u32 920167782, %v59
    %v72 = vor.u32 %v70, %v71
    %v73 = vshll.u32 920167782, %v58
    %v74 = vshrl.u32 1326507024, %v59
    %v75 = vor.u32 %v73, %v74
    %vm76 = vcmp.lt.s32.totalorder %v57, 1
    %vm77 = vcmp.lt.s32.totalorder %v57, 2
    %vm78 = vcmp.lt.s32.totalorder %v57, 3
    %vm79 = vcmp.lt.s32.totalorder %v57, 4
    %v80 = vsel %vm76, %v60, %v63
    %v81 = vsel %vm79, %v69, 2102212464
    %v82 = vsel %vm78, %v66, %v81
    %v83 = vsel %vm77, %v80, %v82
    %v84 = vsel %vm76, %v63, %v66
    %v85 = vsel %vm79, %v72, 920167782
    %v86 = vsel %vm78, %v69, %v85
    %v87 = vsel %vm77, %v84, %v86
    %v88 = vsel %vm76, %v66, %v69
    %v89 = vsel %vm79, %v75, 1326507024
    %v90 = vsel %vm78, %v72, %v89
    %v91 = vsel %vm77, %v88, %v90
    %v92 = vshll.u32 %v52, 8
    %v93 = vmul.u32.u64.compose %v92, %v91
    %v94 = vextract.low.u32 %v93
    %v95 = vextract.high.u32 %v93
    %v96 = vmul.u32.u64.compose %v92, %v87
    %v97 = vextract.low.u32 %v96
    %v98 = vextract.high.u32 %v96
    %v99 = vmul.u32 %v92, %v83
    %v100 = vadd.s32 %v95, %v97
    %vm101 = vc.u32 %v95, %v97
    %v102 = vadd.s32 %v98, 1
    %v103 = vsel %vm101, %v102, %v98
    %v104 = vadd.s32 %v99, %v103
    %v105 = vadd.s32 %v104, 536870912
    %v106 = vshrl.u32 %v105, 30
    %v107 = vshll.u32 %v106, 30
    %v108 = vsub.s32 %v104, %v107
    %vm109 = vcmp.lt.s32.totalorder %v108, 0
    %v110 = vsub.s32 0, %v108
    %v111 = vsel %vm109, %v110, %v108
    %v112 = vclz %v111
    %v113 = vsub.s32 %v112, 2
    %vm114 = vcmp.gt.s32.totalorder 0, %v113
    %v115 = vsel %vm114, 0, %v113
    %v116 = vsub.s32 32, %v115
    %v117 = vshll.u32 %v108, %v115
    %v118 = vshrl.u32 %v100, %v116
    %v119 = vor.u32 %v117, %v118
    %v120 = vsub.s32 4294967266, %v115
    %v121 = vadd.s32 %v120, 127
    %v122 = vshll.u32 %v121, 23
    %v123 = vor.u32 4788187, %v122
    %v124 = vand.u32 2147483647, %v123
    %v126 = vcvt.s32.f32 %v119
    %v127 = vmul.f32 %v126, %v124
    %v128 = vxor.u32 %v127, 2147483648
    %v129 = vsel %vm46, %v128, %v127
    %v130 = vsub.s32 4, %v106
    %v131 = vsel %vm46, %v130, %v106
    %v132 = vsel %vm45, %v37, %v129
    %v133 = vsel %vm45, 0, %v131
    %v134 = vcosq.f32.pop %v132
    %v135 = vsinq.f32.pop %v132
    %vm136 = vweird.f32 %v37
    %v137 = vand.u32 %v133, 3
    %vm138 = vcmp.lt.s32.totalorder %v137, 2
    %vm139 = vcmp.eq.s32.totalorder %v137, 0
    %v140 = vxor.u32 %v135, 2147483648
    %v141 = vsel %vm139, %v134, %v140
    %vm142 = vcmp.eq.s32.totalorder %v137, 2
    %v143 = vxor.u32 %v134, 2147483648
    %v144 = vsel %vm142, %v143, %v135
    %v145 = vsel %vm138, %v141, %v144
    %v146 = vsel %vm136, nan, %v145
    %v147 = vand.u32 2147483647, %v37
    %vm148 = vcmp.le.f32.partialorder %v147, 0.7853982
    %vm149 = vcmp.lt.s32.totalorder %v37, 0
    %v150 = vand.u32 %v37, 2139095040
    %v151 = vshrl.u32 %v150, 23
    %v152 = vsub.s32 %v151, 127
    %v153 = vand.u32 2147483647, %v37
    %v154 = vand.u32 %v153, 8388607
    %v155 = vor.u32 %v154, 8388608
    %v156 = vsub.s32 0, %v155
    %v157 = vadd.s32 %v152, 1
    %vm158 = vcmp.gt.s32.totalorder %v157, 0
    %v159 = vsel %vm158, %v157, 0
    %v160 = vshrl.u32 %v159, 5
    %v161 = vand.u32 %v159, 31
    %v162 = vsub.s32 32, %v161
    %v163 = vshrl.u32 683565275, %v162
    %v164 = vshll.u32 683565275, %v161
    %v165 = vshrl.u32 2475754826, %v162
    %v166 = vor.u32 %v164, %v165
    %v167 = vshll.u32 2475754826, %v161
    %v168 = vshrl.u32 2131351028, %v162
    %v169 = vor.u32 %v167, %v168
    %v170 = vshll.u32 2131351028, %v161
    %v171 = vshrl.u32 2102212464, %v162
    %v172 = vor.u32 %v170, %v171
    %v173 = vshll.u32 2102212464, %v161
    %v174 = vshrl.u32 920167782, %v162
    %v175 = vor.u32 %v173, %v174
    %v176 = vshll.u32 920167782, %v161
    %v177 = vshrl.u32 1326507024, %v162
    %v178 = vor.u32 %v176, %v177
    %vm179 = vcmp.lt.s32.totalorder %v160, 1
    %vm180 = vcmp.lt.s32.totalorder %v160, 2
    %vm181 = vcmp.lt.s32.totalorder %v160, 3
    %vm182 = vcmp.lt.s32.totalorder %v160, 4
    %v183 = vsel %vm179, %v163, %v166
    %v184 = vsel %vm182, %v172, 2102212464
    %v185 = vsel %vm181, %v169, %v184
    %v186 = vsel %vm180, %v183, %v185
    %v187 = vsel %vm179, %v166, %v169
    %v188 = vsel %vm182, %v175, 920167782
    %v189 = vsel %vm181, %v172, %v188
    %v190 = vsel %vm180, %v187, %v189
    %v191 = vsel %vm179, %v169, %v172
    %v192 = vsel %vm182, %v178, 1326507024
    %v193 = vsel %vm181, %v175, %v192
    %v194 = vsel %vm180, %v191, %v193
    %v195 = vshll.u32 %v155, 8
    %v196 = vmul.u32.u64.compose %v195, %v194
    %v197 = vextract.low.u32 %v196
    %v198 = vextract.high.u32 %v196
    %v199 = vmul.u32.u64.compose %v195, %v190
    %v200 = vextract.low.u32 %v199
    %v201 = vextract.high.u32 %v199
    %v202 = vmul.u32 %v195, %v186
    %v203 = vadd.s32 %v198, %v200
    %vm204 = vc.u32 %v198, %v200
    %v205 = vadd.s32 %v201, 1
    %v206 = vsel %vm204, %v205, %v201
    %v207 = vadd.s32 %v202, %v206
    %v208 = vadd.s32 %v207, 536870912
    %v209 = vshrl.u32 %v208, 30
    %v210 = vshll.u32 %v209, 30
    %v211 = vsub.s32 %v207, %v210
    %vm212 = vcmp.lt.s32.totalorder %v211, 0
    %v213 = vsub.s32 0, %v211
    %v214 = vsel %vm212, %v213, %v211
    %v215 = vclz %v214
    %v216 = vsub.s32 %v215, 2
    %vm217 = vcmp.gt.s32.totalorder 0, %v216
    %v218 = vsel %vm217, 0, %v216
    %v219 = vsub.s32 32, %v218
    %v220 = vshll.u32 %v211, %v218
    %v221 = vshrl.u32 %v203, %v219
    %v222 = vor.u32 %v220, %v221
    %v223 = vsub.s32 4294967266, %v218
    %v224 = vadd.s32 %v223, 127
    %v225 = vshll.u32 %v224, 23
    %v226 = vor.u32 4788187, %v225
    %v227 = vand.u32 2147483647, %v226
    %v229 = vcvt.s32.f32 %v222
    %v230 = vmul.f32 %v229, %v227
    %v231 = vxor.u32 %v230, 2147483648
    %v232 = vsel %vm149, %v231, %v230
    %v233 = vsub.s32 4, %v209
    %v234 = vsel %vm149, %v233, %v209
    %v235 = vsel %vm148, %v37, %v232
    %v236 = vsel %vm148, 0, %v234
    %v237 = vcosq.f32.pop %v235
    %v238 = vsinq.f32.pop %v235
    %vm239 = vweird.f32 %v37
    %v240 = vadd.s32 %v236, 3
    %v241 = vand.u32 %v240, 3
    %vm242 = vcmp.lt.s32.totalorder %v241, 2
    %vm243 = vcmp.eq.s32.totalorder %v241, 0
    %v244 = vxor.u32 %v238, 2147483648
    %v245 = vsel %vm243, %v237, %v244
    %vm246 = vcmp.eq.s32.totalorder %v241, 2
    %v247 = vxor.u32 %v237, 2147483648
    %v248 = vsel %vm246, %v247, %v238
    %v249 = vsel %vm242, %v245, %v248
    %v250 = vsel %vm239, nan, %v249
    %v251 = vand.u32 2147483647, %v39
    %vm252 = vcmp.le.f32.partialorder %v251, 0.7853982
    %vm253 = vcmp.lt.s32.totalorder %v39, 0
    %v254 = vand.u32 %v39, 2139095040
    %v255 = vshrl.u32 %v254, 23
    %v256 = vsub.s32 %v255, 127
    %v257 = vand.u32 2147483647, %v39
    %v258 = vand.u32 %v257, 8388607
    %v259 = vor.u32 %v258, 8388608
    %v260 = vsub.s32 0, %v259
    %v261 = vadd.s32 %v256, 1
    %vm262 = vcmp.gt.s32.totalorder %v261, 0
    %v263 = vsel %vm262, %v261, 0
    %v264 = vshrl.u32 %v263, 5
    %v265 = vand.u32 %v263, 31
    %v266 = vsub.s32 32, %v265
    %v267 = vshrl.u32 683565275, %v266
    %v268 = vshll.u32 683565275, %v265
    %v269 = vshrl.u32 2475754826, %v266
    %v270 = vor.u32 %v268, %v269
    %v271 = vshll.u32 2475754826, %v265
    %v272 = vshrl.u32 2131351028, %v266
    %v273 = vor.u32 %v271, %v272
    %v274 = vshll.u32 2131351028, %v265
    %v275 = vshrl.u32 2102212464, %v266
    %v276 = vor.u32 %v274, %v275
    %v277 = vshll.u32 2102212464, %v265
    %v278 = vshrl.u32 920167782, %v266
    %v279 = vor.u32 %v277, %v278
    %v280 = vshll.u32 920167782, %v265
    %v281 = vshrl.u32 1326507024, %v266
    %v282 = vor.u32 %v280, %v281
    %vm283 = vcmp.lt.s32.totalorder %v264, 1
    %vm284 = vcmp.lt.s32.totalorder %v264, 2
    %vm285 = vcmp.lt.s32.totalorder %v264, 3
    %vm286 = vcmp.lt.s32.totalorder %v264, 4
    %v287 = vsel %vm283, %v267, %v270
    %v288 = vsel %vm286, %v276, 2102212464
    %v289 = vsel %vm285, %v273, %v288
    %v290 = vsel %vm284, %v287, %v289
    %v291 = vsel %vm283, %v270, %v273
    %v292 = vsel %vm286, %v279, 920167782
    %v293 = vsel %vm285, %v276, %v292
    %v294 = vsel %vm284, %v291, %v293
    %v295 = vsel %vm283, %v273, %v276
    %v296 = vsel %vm286, %v282, 1326507024
    %v297 = vsel %vm285, %v279, %v296
    %v298 = vsel %vm284, %v295, %v297
    %v299 = vshll.u32 %v259, 8
    %v300 = vmul.u32.u64.compose %v299, %v298
    %v301 = vextract.low.u32 %v300
    %v302 = vextract.high.u32 %v300
    %v303 = vmul.u32.u64.compose %v299, %v294
    %v304 = vextract.low.u32 %v303
    %v305 = vextract.high.u32 %v303
    %v306 = vmul.u32 %v299, %v290
    %v307 = vadd.s32 %v302, %v304
    %vm308 = vc.u32 %v302, %v304
    %v309 = vadd.s32 %v305, 1
    %v310 = vsel %vm308, %v309, %v305
    %v311 = vadd.s32 %v306, %v310
    %v312 = vadd.s32 %v311, 536870912
    %v313 = vshrl.u32 %v312, 30
    %v314 = vshll.u32 %v313, 30
    %v315 = vsub.s32 %v311, %v314
    %vm316 = vcmp.lt.s32.totalorder %v315, 0
    %v317 = vsub.s32 0, %v315
    %v318 = vsel %vm316, %v317, %v315
    %v319 = vclz %v318
    %v320 = vsub.s32 %v319, 2
    %vm321 = vcmp.gt.s32.totalorder 0, %v320
    %v322 = vsel %vm321, 0, %v320
    %v323 = vsub.s32 32, %v322
    %v324 = vshll.u32 %v315, %v322
    %v325 = vshrl.u32 %v307, %v323
    %v326 = vor.u32 %v324, %v325
    %v327 = vsub.s32 4294967266, %v322
    %v328 = vadd.s32 %v327, 127
    %v329 = vshll.u32 %v328, 23
    %v330 = vor.u32 4788187, %v329
    %v331 = vand.u32 2147483647, %v330
    %v333 = vcvt.s32.f32 %v326
    %v334 = vmul.f32 %v333, %v331
    %v335 = vxor.u32 %v334, 2147483648
    %v336 = vsel %vm253, %v335, %v334
    %v337 = vsub.s32 4, %v313
    %v338 = vsel %vm253, %v337, %v313
    %v339 = vsel %vm252, %v39, %v336
    %v340 = vsel %vm252, 0, %v338
    %v341 = vcosq.f32.pop %v339
    %v342 = vsinq.f32.pop %v339
    %vm343 = vweird.f32 %v39
    %v344 = vand.u32 %v340, 3
    %vm345 = vcmp.lt.s32.totalorder %v344, 2
    %vm346 = vcmp.eq.s32.totalorder %v344, 0
    %v347 = vxor.u32 %v342, 2147483648
    %v348 = vsel %vm346, %v341, %v347
    %vm349 = vcmp.eq.s32.totalorder %v344, 2
    %v350 = vxor.u32 %v341, 2147483648
    %v351 = vsel %vm349, %v350, %v342
    %v352 = vsel %vm345, %v348, %v351
    %v353 = vsel %vm343, nan, %v352
    %v354 = vand.u32 2147483647, %v41
    %vm355 = vcmp.le.f32.partialorder %v354, 0.7853982
    %vm356 = vcmp.lt.s32.totalorder %v41, 0
    %v357 = vand.u32 %v41, 2139095040
    %v358 = vshrl.u32 %v357, 23
    %v359 = vsub.s32 %v358, 127
    %v360 = vand.u32 2147483647, %v41
    %v361 = vand.u32 %v360, 8388607
    %v362 = vor.u32 %v361, 8388608
    %v363 = vsub.s32 0, %v362
    %v364 = vadd.s32 %v359, 1
    %vm365 = vcmp.gt.s32.totalorder %v364, 0
    %v366 = vsel %vm365, %v364, 0
    %v367 = vshrl.u32 %v366, 5
    %v368 = vand.u32 %v366, 31
    %v369 = vsub.s32 32, %v368
    %v370 = vshrl.u32 683565275, %v369
    %v371 = vshll.u32 683565275, %v368
    %v372 = vshrl.u32 2475754826, %v369
    %v373 = vor.u32 %v371, %v372
    %v374 = vshll.u32 2475754826, %v368
    %v375 = vshrl.u32 2131351028, %v369
    %v376 = vor.u32 %v374, %v375
    %v377 = vshll.u32 2131351028, %v368
    %v378 = vshrl.u32 2102212464, %v369
    %v379 = vor.u32 %v377, %v378
    %v380 = vshll.u32 2102212464, %v368
    %v381 = vshrl.u32 920167782, %v369
    %v382 = vor.u32 %v380, %v381
    %v383 = vshll.u32 920167782, %v368
    %v384 = vshrl.u32 1326507024, %v369
    %v385 = vor.u32 %v383, %v384
    %vm386 = vcmp.lt.s32.totalorder %v367, 1
    %vm387 = vcmp.lt.s32.totalorder %v367, 2
    %vm388 = vcmp.lt.s32.totalorder %v367, 3
    %vm389 = vcmp.lt.s32.totalorder %v367, 4
    %v390 = vsel %vm386, %v370, %v373
    %v391 = vsel %vm389, %v379, 2102212464
    %v392 = vsel %vm388, %v376, %v391
    %v393 = vsel %vm387, %v390, %v392
    %v394 = vsel %vm386, %v373, %v376
    %v395 = vsel %vm389, %v382, 920167782
    %v396 = vsel %vm388, %v379, %v395
    %v397 = vsel %vm387, %v394, %v396
    %v398 = vsel %vm386, %v376, %v379
    %v399 = vsel %vm389, %v385, 1326507024
    %v400 = vsel %vm388, %v382, %v399
    %v401 = vsel %vm387, %v398, %v400
    %v402 = vshll.u32 %v362, 8
    %v403 = vmul.u32.u64.compose %v402, %v401
    %v404 = vextract.low.u32 %v403
    %v405 = vextract.high.u32 %v403
    %v406 = vmul.u32.u64.compose %v402, %v397
    %v407 = vextract.low.u32 %v406
    %v408 = vextract.high.u32 %v406
    %v409 = vmul.u32 %v402, %v393
    %v410 = vadd.s32 %v405, %v407
    %vm411 = vc.u32 %v405, %v407
    %v412 = vadd.s32 %v408, 1
    %v413 = vsel %vm411, %v412, %v408
    %v414 = vadd.s32 %v409, %v413
    %v415 = vadd.s32 %v414, 536870912
    %v416 = vshrl.u32 %v415, 30
    %v417 = vshll.u32 %v416, 30
    %v418 = vsub.s32 %v414, %v417
    %vm419 = vcmp.lt.s32.totalorder %v418, 0
    %v420 = vsub.s32 0, %v418
    %v421 = vsel %vm419, %v420, %v418
    %v422 = vclz %v421
    %v423 = vsub.s32 %v422, 2
    %vm424 = vcmp.gt.s32.totalorder 0, %v423
    %v425 = vsel %vm424, 0, %v423
    %v426 = vsub.s32 32, %v425
    %v427 = vshll.u32 %v418, %v425
    %v428 = vshrl.u32 %v410, %v426
    %v429 = vor.u32 %v427, %v428
    %v430 = vsub.s32 4294967266, %v425
    %v431 = vadd.s32 %v430, 127
    %v432 = vshll.u32 %v431, 23
    %v433 = vor.u32 4788187, %v432
    %v434 = vand.u32 2147483647, %v433
    %v436 = vcvt.s32.f32 %v429
    %v437 = vmul.f32 %v436, %v434
    %v438 = vxor.u32 %v437, 2147483648
    %v439 = vsel %vm356, %v438, %v437
    %v440 = vsub.s32 4, %v416
    %v441 = vsel %vm356, %v440, %v416
    %v442 = vsel %vm355, %v41, %v439
    %v443 = vsel %vm355, 0, %v441
    %v444 = vcosq.f32.pop %v442
    %v445 = vsinq.f32.pop %v442
    %vm446 = vweird.f32 %v41
    %v447 = vand.u32 %v443, 3
    %vm448 = vcmp.lt.s32.totalorder %v447, 2
    %vm449 = vcmp.eq.s32.totalorder %v447, 0
    %v450 = vxor.u32 %v445, 2147483648
    %v451 = vsel %vm449, %v444, %v450
    %vm452 = vcmp.eq.s32.totalorder %v447, 2
    %v453 = vxor.u32 %v444, 2147483648
    %v454 = vsel %vm452, %v453, %v445
    %v455 = vsel %vm448, %v451, %v454
    %v456 = vsel %vm446, nan, %v455
    %v457 = vand.u32 2147483647, %v41
    %vm458 = vcmp.le.f32.partialorder %v457, 0.7853982
    %vm459 = vcmp.lt.s32.totalorder %v41, 0
    %v460 = vand.u32 %v41, 2139095040
    %v461 = vshrl.u32 %v460, 23
    %v462 = vsub.s32 %v461, 127
    %v463 = vand.u32 2147483647, %v41
    %v464 = vand.u32 %v463, 8388607
    %v465 = vor.u32 %v464, 8388608
    %v466 = vsub.s32 0, %v465
    %v467 = vadd.s32 %v462, 1
    %vm468 = vcmp.gt.s32.totalorder %v467, 0
    %v469 = vsel %vm468, %v467, 0
    %v470 = vshrl.u32 %v469, 5
    %v471 = vand.u32 %v469, 31
    %v472 = vsub.s32 32, %v471
    %v473 = vshrl.u32 683565275, %v472
    %v474 = vshll.u32 683565275, %v471
    %v475 = vshrl.u32 2475754826, %v472
    %v476 = vor.u32 %v474, %v475
    %v477 = vshll.u32 2475754826, %v471
    %v478 = vshrl.u32 2131351028, %v472
    %v479 = vor.u32 %v477, %v478
    %v480 = vshll.u32 2131351028, %v471
    %v481 = vshrl.u32 2102212464, %v472
    %v482 = vor.u32 %v480, %v481
    %v483 = vshll.u32 2102212464, %v471
    %v484 = vshrl.u32 920167782, %v472
    %v485 = vor.u32 %v483, %v484
    %v486 = vshll.u32 920167782, %v471
    %v487 = vshrl.u32 1326507024, %v472
    %v488 = vor.u32 %v486, %v487
    %vm489 = vcmp.lt.s32.totalorder %v470, 1
    %vm490 = vcmp.lt.s32.totalorder %v470, 2
    %vm491 = vcmp.lt.s32.totalorder %v470, 3
    %vm492 = vcmp.lt.s32.totalorder %v470, 4
    %v493 = vsel %vm489, %v473, %v476
    %v494 = vsel %vm492, %v482, 2102212464
    %v495 = vsel %vm491, %v479, %v494
    %v496 = vsel %vm490, %v493, %v495
    %v497 = vsel %vm489, %v476, %v479
    %v498 = vsel %vm492, %v485, 920167782
    %v499 = vsel %vm491, %v482, %v498
    %v500 = vsel %vm490, %v497, %v499
    %v501 = vsel %vm489, %v479, %v482
    %v502 = vsel %vm492, %v488, 1326507024
    %v503 = vsel %vm491, %v485, %v502
    %v504 = vsel %vm490, %v501, %v503
    %v505 = vshll.u32 %v465, 8
    %v506 = vmul.u32.u64.compose %v505, %v504
    %v507 = vextract.low.u32 %v506
    %v508 = vextract.high.u32 %v506
    %v509 = vmul.u32.u64.compose %v505, %v500
    %v510 = vextract.low.u32 %v509
    %v511 = vextract.high.u32 %v509
    %v512 = vmul.u32 %v505, %v496
    %v513 = vadd.s32 %v508, %v510
    %vm514 = vc.u32 %v508, %v510
    %v515 = vadd.s32 %v511, 1
    %v516 = vsel %vm514, %v515, %v511
    %v517 = vadd.s32 %v512, %v516
    %v518 = vadd.s32 %v517, 536870912
    %v519 = vshrl.u32 %v518, 30
    %v520 = vshll.u32 %v519, 30
    %v521 = vsub.s32 %v517, %v520
    %vm522 = vcmp.lt.s32.totalorder %v521, 0
    %v523 = vsub.s32 0, %v521
    %v524 = vsel %vm522, %v523, %v521
    %v525 = vclz %v524
    %v526 = vsub.s32 %v525, 2
    %vm527 = vcmp.gt.s32.totalorder 0, %v526
    %v528 = vsel %vm527, 0, %v526
    %v529 = vsub.s32 32, %v528
    %v530 = vshll.u32 %v521, %v528
    %v531 = vshrl.u32 %v513, %v529
    %v532 = vor.u32 %v530, %v531
    %v533 = vsub.s32 4294967266, %v528
    %v534 = vadd.s32 %v533, 127
    %v535 = vshll.u32 %v534, 23
    %v536 = vor.u32 4788187, %v535
    %v537 = vand.u32 2147483647, %v536
    %v539 = vcvt.s32.f32 %v532
    %v540 = vmul.f32 %v539, %v537
    %v541 = vxor.u32 %v540, 2147483648
    %v542 = vsel %vm459, %v541, %v540
    %v543 = vsub.s32 4, %v519
    %v544 = vsel %vm459, %v543, %v519
    %v545 = vsel %vm458, %v41, %v542
    %v546 = vsel %vm458, 0, %v544
    %v547 = vcosq.f32.pop %v545
    %v548 = vsinq.f32.pop %v545
    %vm549 = vweird.f32 %v41
    %v550 = vadd.s32 %v546, 3
    %v551 = vand.u32 %v550, 3
    %vm552 = vcmp.lt.s32.totalorder %v551, 2
    %vm553 = vcmp.eq.s32.totalorder %v551, 0
    %v554 = vxor.u32 %v548, 2147483648
    %v555 = vsel %vm553, %v547, %v554
    %vm556 = vcmp.eq.s32.totalorder %v551, 2
    %v557 = vxor.u32 %v547, 2147483648
    %v558 = vsel %vm556, %v557, %v548
    %v559 = vsel %vm552, %v555, %v558
    %v560 = vsel %vm549, nan, %v559
    %v561 = vand.u32 2147483647, %v43
    %vm562 = vcmp.le.f32.partialorder %v561, 0.7853982
    %vm563 = vcmp.lt.s32.totalorder %v43, 0
    %v564 = vand.u32 %v43, 2139095040
    %v565 = vshrl.u32 %v564, 23
    %v566 = vsub.s32 %v565, 127
    %v567 = vand.u32 2147483647, %v43
    %v568 = vand.u32 %v567, 8388607
    %v569 = vor.u32 %v568, 8388608
    %v570 = vsub.s32 0, %v569
    %v571 = vadd.s32 %v566, 1
    %vm572 = vcmp.gt.s32.totalorder %v571, 0
    %v573 = vsel %vm572, %v571, 0
    %v574 = vshrl.u32 %v573, 5
    %v575 = vand.u32 %v573, 31
    %v576 = vsub.s32 32, %v575
    %v577 = vshrl.u32 683565275, %v576
    %v578 = vshll.u32 683565275, %v575
    %v579 = vshrl.u32 2475754826, %v576
    %v580 = vor.u32 %v578, %v579
    %v581 = vshll.u32 2475754826, %v575
    %v582 = vshrl.u32 2131351028, %v576
    %v583 = vor.u32 %v581, %v582
    %v584 = vshll.u32 2131351028, %v575
    %v585 = vshrl.u32 2102212464, %v576
    %v586 = vor.u32 %v584, %v585
    %v587 = vshll.u32 2102212464, %v575
    %v588 = vshrl.u32 920167782, %v576
    %v589 = vor.u32 %v587, %v588
    %v590 = vshll.u32 920167782, %v575
    %v591 = vshrl.u32 1326507024, %v576
    %v592 = vor.u32 %v590, %v591
    %vm593 = vcmp.lt.s32.totalorder %v574, 1
    %vm594 = vcmp.lt.s32.totalorder %v574, 2
    %vm595 = vcmp.lt.s32.totalorder %v574, 3
    %vm596 = vcmp.lt.s32.totalorder %v574, 4
    %v597 = vsel %vm593, %v577, %v580
    %v598 = vsel %vm596, %v586, 2102212464
    %v599 = vsel %vm595, %v583, %v598
    %v600 = vsel %vm594, %v597, %v599
    %v601 = vsel %vm593, %v580, %v583
    %v602 = vsel %vm596, %v589, 920167782
    %v603 = vsel %vm595, %v586, %v602
    %v604 = vsel %vm594, %v601, %v603
    %v605 = vsel %vm593, %v583, %v586
    %v606 = vsel %vm596, %v592, 1326507024
    %v607 = vsel %vm595, %v589, %v606
    %v608 = vsel %vm594, %v605, %v607
    %v609 = vshll.u32 %v569, 8
    %v610 = vmul.u32.u64.compose %v609, %v608
    %v611 = vextract.low.u32 %v610
    %v612 = vextract.high.u32 %v610
    %v613 = vmul.u32.u64.compose %v609, %v604
    %v614 = vextract.low.u32 %v613
    %v615 = vextract.high.u32 %v613
    %v616 = vmul.u32 %v609, %v600
    %v617 = vadd.s32 %v612, %v614
    %vm618 = vc.u32 %v612, %v614
    %v619 = vadd.s32 %v615, 1
    %v620 = vsel %vm618, %v619, %v615
    %v621 = vadd.s32 %v616, %v620
    %v622 = vadd.s32 %v621, 536870912
    %v623 = vshrl.u32 %v622, 30
    %v624 = vshll.u32 %v623, 30
    %v625 = vsub.s32 %v621, %v624
    %vm626 = vcmp.lt.s32.totalorder %v625, 0
    %v627 = vsub.s32 0, %v625
    %v628 = vsel %vm626, %v627, %v625
    %v629 = vclz %v628
    %v630 = vsub.s32 %v629, 2
    %vm631 = vcmp.gt.s32.totalorder 0, %v630
    %v632 = vsel %vm631, 0, %v630
    %v633 = vsub.s32 32, %v632
    %v634 = vshll.u32 %v625, %v632
    %v635 = vshrl.u32 %v617, %v633
    %v636 = vor.u32 %v634, %v635
    %v637 = vsub.s32 4294967266, %v632
    %v638 = vadd.s32 %v637, 127
    %v639 = vshll.u32 %v638, 23
    %v640 = vor.u32 4788187, %v639
    %v641 = vand.u32 2147483647, %v640
    %v643 = vcvt.s32.f32 %v636
    %v644 = vmul.f32 %v643, %v641
    %v645 = vxor.u32 %v644, 2147483648
    %v646 = vsel %vm563, %v645, %v644
    %v647 = vsub.s32 4, %v623
    %v648 = vsel %vm563, %v647, %v623
    %v649 = vsel %vm562, %v43, %v646
    %v650 = vsel %vm562, 0, %v648
    %v651 = vcosq.f32.pop %v649
    %v652 = vsinq.f32.pop %v649
    %vm653 = vweird.f32 %v43
    %v654 = vand.u32 %v650, 3
    %vm655 = vcmp.lt.s32.totalorder %v654, 2
    %vm656 = vcmp.eq.s32.totalorder %v654, 0
    %v657 = vxor.u32 %v652, 2147483648
    %v658 = vsel %vm656, %v651, %v657
    %vm659 = vcmp.eq.s32.totalorder %v654, 2
    %v660 = vxor.u32 %v651, 2147483648
    %v661 = vsel %vm659, %v660, %v652
    %v662 = vsel %vm655, %v658, %v661
    %v663 = vsel %vm653, nan, %v662
    %v664 = vand.u32 2147483647, %v43
    %vm665 = vcmp.le.f32.partialorder %v664, 0.7853982
    %vm666 = vcmp.lt.s32.totalorder %v43, 0
    %v667 = vand.u32 %v43, 2139095040
    %v668 = vshrl.u32 %v667, 23
    %v669 = vsub.s32 %v668, 127
    %v670 = vand.u32 2147483647, %v43
    %v671 = vand.u32 %v670, 8388607
    %v672 = vor.u32 %v671, 8388608
    %v673 = vsub.s32 0, %v672
    %v674 = vadd.s32 %v669, 1
    %vm675 = vcmp.gt.s32.totalorder %v674, 0
    %v676 = vsel %vm675, %v674, 0
    %v677 = vshrl.u32 %v676, 5
    %v678 = vand.u32 %v676, 31
    %v679 = vsub.s32 32, %v678
    %v680 = vshrl.u32 683565275, %v679
    %v681 = vshll.u32 683565275, %v678
    %v682 = vshrl.u32 2475754826, %v679
    %v683 = vor.u32 %v681, %v682
    %v684 = vshll.u32 2475754826, %v678
    %v685 = vshrl.u32 2131351028, %v679
    %v686 = vor.u32 %v684, %v685
    %v687 = vshll.u32 2131351028, %v678
    %v688 = vshrl.u32 2102212464, %v679
    %v689 = vor.u32 %v687, %v688
    %v690 = vshll.u32 2102212464, %v678
    %v691 = vshrl.u32 920167782, %v679
    %v692 = vor.u32 %v690, %v691
    %v693 = vshll.u32 920167782, %v678
    %v694 = vshrl.u32 1326507024, %v679
    %v695 = vor.u32 %v693, %v694
    %vm696 = vcmp.lt.s32.totalorder %v677, 1
    %vm697 = vcmp.lt.s32.totalorder %v677, 2
    %vm698 = vcmp.lt.s32.totalorder %v677, 3
    %vm699 = vcmp.lt.s32.totalorder %v677, 4
    %v700 = vsel %vm696, %v680, %v683
    %v701 = vsel %vm699, %v689, 2102212464
    %v702 = vsel %vm698, %v686, %v701
    %v703 = vsel %vm697, %v700, %v702
    %v704 = vsel %vm696, %v683, %v686
    %v705 = vsel %vm699, %v692, 920167782
    %v706 = vsel %vm698, %v689, %v705
    %v707 = vsel %vm697, %v704, %v706
    %v708 = vsel %vm696, %v686, %v689
    %v709 = vsel %vm699, %v695, 1326507024
    %v710 = vsel %vm698, %v692, %v709
    %v711 = vsel %vm697, %v708, %v710
    %v712 = vshll.u32 %v672, 8
    %v713 = vmul.u32.u64.compose %v712, %v711
    %v714 = vextract.low.u32 %v713
    %v715 = vextract.high.u32 %v713
    %v716 = vmul.u32.u64.compose %v712, %v707
    %v717 = vextract.low.u32 %v716
    %v718 = vextract.high.u32 %v716
    %v719 = vmul.u32 %v712, %v703
    %v720 = vadd.s32 %v715, %v717
    %vm721 = vc.u32 %v715, %v717
    %v722 = vadd.s32 %v718, 1
    %v723 = vsel %vm721, %v722, %v718
    %v724 = vadd.s32 %v719, %v723
    %v725 = vadd.s32 %v724, 536870912
    %v726 = vshrl.u32 %v725, 30
    %v727 = vshll.u32 %v726, 30
    %v728 = vsub.s32 %v724, %v727
    %vm729 = vcmp.lt.s32.totalorder %v728, 0
    %v730 = vsub.s32 0, %v728
    %v731 = vsel %vm729, %v730, %v728
    %v732 = vclz %v731
    %v733 = vsub.s32 %v732, 2
    %vm734 = vcmp.gt.s32.totalorder 0, %v733
    %v735 = vsel %vm734, 0, %v733
    %v736 = vsub.s32 32, %v735
    %v737 = vshll.u32 %v728, %v735
    %v738 = vshrl.u32 %v720, %v736
    %v739 = vor.u32 %v737, %v738
    %v740 = vsub.s32 4294967266, %v735
    %v741 = vadd.s32 %v740, 127
    %v742 = vshll.u32 %v741, 23
    %v743 = vor.u32 4788187, %v742
    %v744 = vand.u32 2147483647, %v743
    %v746 = vcvt.s32.f32 %v739
    %v747 = vmul.f32 %v746, %v744
    %v748 = vxor.u32 %v747, 2147483648
    %v749 = vsel %vm666, %v748, %v747
    %v750 = vsub.s32 4, %v726
    %v751 = vsel %vm666, %v750, %v726
    %v752 = vsel %vm665, %v43, %v749
    %v753 = vsel %vm665, 0, %v751
    %v754 = vcosq.f32.pop %v752
    %v755 = vsinq.f32.pop %v752
    %vm756 = vweird.f32 %v43
    %v757 = vadd.s32 %v753, 3
    %v758 = vand.u32 %v757, 3
    %vm759 = vcmp.lt.s32.totalorder %v758, 2
    %vm760 = vcmp.eq.s32.totalorder %v758, 0
    %v761 = vxor.u32 %v755, 2147483648
    %v762 = vsel %vm760, %v754, %v761
    %vm763 = vcmp.eq.s32.totalorder %v758, 2
    %v764 = vxor.u32 %v754, 2147483648
    %v765 = vsel %vm763, %v764, %v755
    %v766 = vsel %vm759, %v762, %v765
    %v767 = vsel %vm756, nan, %v766
    %s768 = sld [smem:[#allocation2]]
    %s769 = sld [smem:[#allocation2 + $0x1]]
    %s770 = sld [smem:[#allocation2 + $0x2]]
    %s771 = sld [smem:[#allocation2 + $0x3]]
    %s772 = sld [smem:[#allocation2 + $0x4]]
    %s773 = sld [smem:[#allocation2 + $0x5]]
    %v774 = vmul.f32 %v146, %v456
    %v775 = vstv %s770
    %v776 = vmul.f32 %v775, %v146
    %v777 = vmul.f32 %v250, %v560
    %v778 = vstv %s772
    %v779 = vmul.f32 %v778, %v777
    %v780 = vsub.f32 %v776, %v779
    %781 = vst [vmem:[#allocation7] sm:$0xff] %v780
    %v782 = vstv %s769
    %v783 = vmul.f32 %v782, %v353
    %s784 = scalar_lea.vmem [#allocation7], 8
    %785 = vst [vmem:[%s784] sm:$0xff] %v783
    %v786 = vstv %s768
    %v787 = vmul.f32 %v786, %v774
    %s788 = scalar_lea.vmem [#allocation7], 16
    %789 = vst [vmem:[%s788] sm:$0xff] %v787
    %v790 = vmul.f32 %v774, %v663
    %v791 = vstv %s771
    %v792 = vmul.f32 %v791, %v790
    %v793 = vstv %s773
    %v794 = vmul.f32 %v793, %v767
    %v795 = vsub.f32 %v792, %v794
    %s796 = scalar_lea.vmem [#allocation7], 24
    %797 = vst [vmem:[%s796] sm:$0xff] %v795
    // Predicated region
    $region18: #{tpu_custom_call.1} parent=1 // pred_check
      _
    $region19: #{tpu_custom_call.1} parent=1 // pred_check_branch
      %799 = sbr.rel (0) target = $region21
    $region20: #{tpu_custom_call.1} parent=1 // pred_region
      %s801 = ssub.s32 512, 512
      %802 = vsyncadd [#allocation4], %s801
      %s803 = sshll.u32 [#allocation7], 4
      %s804 = int_to_ptr.vmem [resolvable:$true] %s803
      %809 = dma.vmem_to_hbm [thread:$0]  %s804, 512, %s2, [#allocation4], 128, 128, 8
    $region21: #{tpu_custom_call.1} parent=1 // pred_fallthru
      _
    // Predicated region
    $region22: #{tpu_custom_call.1} parent=1 // pred_check
      _
    $region23: #{tpu_custom_call.1} parent=1 // pred_check_branch
      %811 = sbr.rel (0) target = $region25
    $region24: #{tpu_custom_call.1} parent=1 // pred_region
      %812 = dma.done [#allocation4], 512
    $region25: #{tpu_custom_call.1} parent=1 // pred_fallthru
      _
    %813 = vsyncpa [#allocation3], 1
    %814 = vsyncpa [#allocation4], 1
    %815 = vsyncpa [#allocation5], 1

</llo_original>
